<compile_context>
chip_gen: v7x
topology: tpu7x:2x2x1
jax: 0.10.0
libtpu: 0.0.40
codegen_flags: <defaults>
</compile_context>

<pallas_src>
import numpy as np

import jax
import jax.numpy as jnp
from jax import lax
from jax.experimental import pallas as pl
from jax.experimental.pallas import tpu as pltpu


# ---------------------------------------------------------------------------
# Fused kernel factory: (optional LN) -> pad -> conv -> bias -> ReLU
# ---------------------------------------------------------------------------
def _make_fused_kernel(*, Nb, C, Hp, Wp, p, k, use_ln, Wpp, Lout, c_out,
                       use_bmat, eps=1e-5):
    """Per-grid-step kernel over Nb samples.

    x_ref    : (Nb, C, Hp*Wp)     pooled (or raw) activation, f32
    w_ref    : (c_out, k*k*C)     conv weights, (dy, dx, ci)-major columns
    b_ref    : (c_out, 1)         bias (broadcast over lanes), f32
    o_ref    : (Nb, c_out, Lout)  "wide" conv output, Lout = Ho * Wpp
    apad_ref : VMEM (Nb*C, Lpad)  zero-padded activations, spatial on lanes
    bmat_ref : VMEM (k*k*C, Nb*Lout)  im2col slab (small-C path only)
    """
    inv_n = 1.0 / float(C * Hp * Wp)

    def kernel(x_ref, w_ref, b_ref, o_ref, apad_ref, *bmat):
        # ---- one-time zero of the padded-activation scratch ---------------
        # Scratch persists across grid steps; every step rewrites all interior
        # lanes, and pad/tail lanes only contribute to wide-output columns the
        # wrapper slices off.  Requires "arbitrary" grid semantics (per-core
        # scratch must see program_id 0).
        @pl.when(pl.program_id(0) == 0)
        def _():
            apad_ref[...] = jnp.zeros_like(apad_ref)

        # ---- per sample: (optional) LayerNorm, scatter rows into apad ------
        for b in range(Nb):
            act = x_ref[b]                                  # (C, Hp*Wp), f32
            if use_ln:
                # one-pass stats over all (C, Hp, Wp) elements, f32
                s = jnp.sum(act)
                ss = jnp.sum(act * act)
                mean = s * inv_n
                var = ss * inv_n - mean * mean
                act = (act - mean) * lax.rsqrt(var + eps)
            act = act.astype(apad_ref.dtype)
            r0 = b * C
            for h in range(Hp):
                col = (h + p) * Wpp + p
                apad_ref[r0:r0 + C, col:col + Wp] = act[:, h * Wp:(h + 1) * Wp]

        bias = b_ref[...]                                   # (c_out, 1), f32

        if use_bmat:
            # ---- small-C path: im2col slab + ONE lane-dense MXU matmul -----
            bmat_ref = bmat[0]
            for b in range(Nb):
                r0 = b * C
                c0 = b * Lout
                for dy in range(k):
                    for dx in range(k):
                        t = dy * k + dx
                        off = dy * Wpp + dx
                        bmat_ref[t * C:(t + 1) * C, c0:c0 + Lout] = (
                            apad_ref[r0:r0 + C, off:off + Lout])
            acc = jnp.dot(w_ref[...], bmat_ref[...],
                          preferred_element_type=jnp.float32)
            acc = jnp.maximum(acc + bias, 0.0)
            for b in range(Nb):
                o_ref[b] = acc[:, b * Lout:(b + 1) * Lout].astype(o_ref.dtype)
        else:
            # ---- large-C path: no im2col slab, k*k accumulating matmuls ----
            for b in range(Nb):
                r0 = b * C
                acc = jnp.zeros((c_out, Lout), jnp.float32)
                for dy in range(k):
                    for dx in range(k):
                        t = dy * k + dx
                        off = dy * Wpp + dx
                        acc = acc + jnp.dot(
                            w_ref[:, t * C:(t + 1) * C],
                            apad_ref[r0:r0 + C, off:off + Lout],
                            preferred_element_type=jnp.float32)
                o_ref[b] = jnp.maximum(acc + bias, 0.0).astype(o_ref.dtype)

    return kernel


# ---------------------------------------------------------------------------
# Wrapper: single fused pallas_call over the batch
# ---------------------------------------------------------------------------
def pool_conv_forward(x, weight, bias, *, m, k, use_pool,
                      compute_dtype=jnp.float32,
                      vmem_budget_bytes=12 << 20):
    N, C, H, W = x.shape
    c_out = weight.shape[0]
    p = k // 2

    if use_pool and m > 1:
        Hp, Wp = H // m, W // m
        # m x m / stride-m max-pool in XLA: writes only the m^2-smaller pooled
        # tensor; LN / pad / im2col / conv / bias / ReLU stay fused below.
        pooled = lax.reduce_window(x, -jnp.inf, lax.max,
                                   (1, 1, m, m), (1, 1, m, m), "VALID")
        acts = pooled.reshape(N, C, Hp * Wp)
        use_ln = True
    else:
        Hp, Wp = H, W
        acts = x.reshape(N, C, H * W)       # free reshape, no HBM copy
        use_ln = False

    Wpp = Wp + 2 * p                        # padded width
    Hpp = Hp + 2 * p
    Ho = Hpp - k + 1
    Wo = Wpp - k + 1
    Lp = Hpp * Wpp                          # padded flattened spatial length
    Lpad = Lp + k                           # + tail so last shifted view is in bounds
    Lout = Ho * Wpp                         # "wide" output columns (pad cols dropped later)
    KKC = k * k * C
    Sp = Hp * Wp

    # Skip the im2col slab (k*k accumulating matmuls) once C is MXU-sized.
    use_bmat = C < 64

    # ---- choose Nb (samples per grid step) from a VMEM budget --------------
    csize = np.dtype(compute_dtype).itemsize
    xsize = x.dtype.itemsize

    def footprint(nb):
        fb = 2 * nb * C * Sp * xsize           # input block, double-buffered
        fb += 2 * nb * c_out * Lout * xsize    # output block, double-buffered
        fb += 2 * c_out * KKC * csize          # resident weights
        fb += 2 * c_out * 4                    # bias
        fb += nb * C * Lpad * csize            # apad scratch
        if use_bmat:
            fb += KKC * nb * Lout * csize      # im2col scratch
        return fb

    Nb = 1
    for d in range(1, N + 1):
        if N % d == 0 and footprint(d) <= vmem_budget_bytes:
            Nb = d

    vmem_limit = int(min(64 << 20, max(32 << 20, 2 * footprint(Nb))))

    # (c_out, (dy, dx, ci)) — matches apad/bmat row ordering t*C + ci, t=dy*k+dx.
    w_flat = weight.transpose(0, 2, 3, 1).reshape(c_out, KKC).astype(compute_dtype)
    b_col = bias.reshape(c_out, 1).astype(jnp.float32)

    kernel = _make_fused_kernel(Nb=Nb, C=C, Hp=Hp, Wp=Wp, p=p, k=k,
                                use_ln=use_ln, Wpp=Wpp, Lout=Lout,
                                c_out=c_out, use_bmat=use_bmat)

    scratch = [pltpu.VMEM((Nb * C, Lpad), compute_dtype)]
    if use_bmat:
        scratch.append(pltpu.VMEM((KKC, Nb * Lout), compute_dtype))

    out_wide = pl.pallas_call(
        kernel,
        out_shape=jax.ShapeDtypeStruct((N, c_out, Lout), x.dtype),
        grid=(N // Nb,),
        in_specs=[
            pl.BlockSpec((Nb, C, Sp), lambda n: (n, 0, 0)),
            pl.BlockSpec((c_out, KKC), lambda n: (0, 0)),   # resident weights
            pl.BlockSpec((c_out, 1), lambda n: (0, 0)),     # resident bias
        ],
        out_specs=pl.BlockSpec((Nb, c_out, Lout), lambda n: (n, 0, 0)),
        scratch_shapes=scratch,
        compiler_params=pltpu.CompilerParams(
            # "arbitrary": the zero-once apad init relies on per-core scratch
            # seeing grid step 0; a megacore-parallel split would break it.
            dimension_semantics=("arbitrary",),
            vmem_limit_bytes=vmem_limit,
        ),
    )(acts, w_flat, b_col)

    # Drop the pad columns of the wide output; result is already NCHW-ordered.
    # TODO(synk): for large c_out fuse this column drop into the consumer.
    return out_wide.reshape(N, c_out, Ho, Wpp)[:, :, :, :Wo]


# ---------------------------------------------------------------------------
# PoolConv module (deterministic synthetic parameters)
# ---------------------------------------------------------------------------
class PoolConvPallas:
    def __init__(self, c_in, m, c_out, k, key, compute_dtype=jnp.float32):
        assert c_in > 0 and m >= 1 and c_out > 0 and k > 0
        self.use_pool = m > 1
        self.m = m
        self.k = k
        self.compute_dtype = compute_dtype
        kw, kb = jax.random.split(key)
        fan_in = c_in * k * k
        bound = 1.0 / (fan_in ** 0.5)
        self.weight = jax.random.uniform(
            kw, (c_out, c_in, k, k), jnp.float32, -bound, bound)
        self.bias = jax.random.uniform(kb, (c_out,), jnp.float32, -bound, bound)

    def __call__(self, x):
        return pool_conv_forward(
            x, self.weight, self.bias,
            m=self.m, k=self.k, use_pool=self.use_pool,
            compute_dtype=self.compute_dtype)


# ---------------------------------------------------------------------------
# Pure-JAX reference for a correctness sanity check
# ---------------------------------------------------------------------------
def _reference(x, module):
    if module.use_pool:
        m = module.m
        x = lax.reduce_window(
            x, -jnp.inf, lax.max, (1, 1, m, m), (1, 1, m, m), "VALID")
        mean = jnp.mean(x, axis=(1, 2, 3), keepdims=True)
        var = jnp.mean((x - mean) ** 2, axis=(1, 2, 3), keepdims=True)
        x = (x - mean) * lax.rsqrt(var + 1e-5)
    p = module.k // 2
    y = lax.conv_general_dilated(
        x, module.weight, window_strides=(1, 1), padding=[(p, p), (p, p)],
        dimension_numbers=("NCHW", "OIHW", "NCHW"),
    ) + module.bias.reshape(1, -1, 1, 1)
    return jnp.maximum(y, 0.0)


if __name__ == "__main__":
    key = jax.random.PRNGKey(0)
    kx, kparams = jax.random.split(key)

    c_in, m, c_out, k = 4, 2, 8, 3
    x = jax.random.normal(kx, (2, c_in, 16, 16), jnp.float32)   # NCHW

    # pooled path (m > 1): max-pool -> LN -> conv -> ReLU
    module = PoolConvPallas(c_in, m, c_out, k, kparams)
    out = jax.block_until_ready(module(x))
    ref = _reference(x, module)
    assert out.shape == ref.shape == (2, c_out, 8, 8), (out.shape, ref.shape)
    assert jnp.allclose(out, ref, atol=1e-4, rtol=1e-4)

    # no-pool path (m == 1): conv -> ReLU only
    module1 = PoolConvPallas(c_in, 1, c_out, k, kparams)
    out1 = jax.block_until_ready(module1(x))
    ref1 = _reference(x, module1)
    assert out1.shape == ref1.shape == (2, c_out, 16, 16), (out1.shape, ref1.shape)
    assert jnp.allclose(out1, ref1, atol=1e-4, rtol=1e-4)

    print("KERNEL_OK")
</pallas_src>

<mosaic_0001>
module attributes {stable_mosaic.version = 11 : i64} {
  func.func @kernel(%arg0: i32, %arg1: memref<2x4x64xf32, #tpu.memory_space<vmem>>, %arg2: memref<8x36xf32, #tpu.memory_space<vmem>>, %arg3: memref<8x1xf32, #tpu.memory_space<vmem>>, %arg4: memref<2x8x80xf32, #tpu.memory_space<vmem>>, %arg5: memref<8x103xf32, #tpu.memory_space<vmem>>, %arg6: memref<36x160xf32, #tpu.memory_space<vmem>>) attributes {dimension_semantics = [#tpu.dimension_semantics<arbitrary>], iteration_bounds = array<i64: 1>, scalar_prefetch = 0 : i64, scratch_operands = 2 : i64, tpu.core_type = #tpu.core_type<tc>, window_params = [{transform_indices = @transform_0, window_bounds = array<i64: 2, 4, 64>}, {pipeline_mode = #tpu.pipeline_mode<synchronous>, transform_indices = @transform_1, window_bounds = array<i64: 8, 36>}, {pipeline_mode = #tpu.pipeline_mode<synchronous>, transform_indices = @transform_2, window_bounds = array<i64: 8, 1>}, {transform_indices = @transform_3, window_bounds = array<i64: 2, 8, 80>}]} {
    %c0_i32 = arith.constant 0 : i32
    %0 = arith.cmpi eq, %arg0, %c0_i32 : i32
    %1 = arith.extui %0 : i1 to i32
    %c0_i32_0 = arith.constant 0 : i32
    %2 = arith.cmpi ne, %1, %c0_i32_0 : i32
    scf.if %2 {
      %cst_112 = arith.constant 0.000000e+00 : f32
      %129 = vector.broadcast %cst_112 : f32 to vector<8x103xf32>
      %c0_113 = arith.constant 0 : index
      %c0_114 = arith.constant 0 : index
      %130 = vector.load %arg5[%c0_113, %c0_114] : memref<8x103xf32, #tpu.memory_space<vmem>>, vector<8x103xf32>
      tpu.vector_store %arg5[%c0_113, %c0_114], %129 {strides = array<i32>} : memref<8x103xf32, #tpu.memory_space<vmem>>, vector<8x103xf32>,
    } else {
    }
    %c0 = arith.constant 0 : index
    %c0_1 = arith.constant 0 : index
    %c0_2 = arith.constant 0 : index
    %3 = vector.load %arg1[%c0, %c0_1, %c0_2] : memref<2x4x64xf32, #tpu.memory_space<vmem>>, vector<1x4x64xf32>
    %4 = vector.shape_cast %3 : vector<1x4x64xf32> to vector<4x64xf32>
    %5 = vector.shape_cast %4 : vector<4x64xf32> to vector<1x4x64xf32>
    %cst = arith.constant dense<0.000000e+00> : vector<1xf32>
    %6 = vector.multi_reduction <add>, %5, %cst [1, 2] : vector<1x4x64xf32> to vector<1xf32>
    %7 = vector.shape_cast %6 : vector<1xf32> to vector<1x1x1xf32>
    %8 = vector.extract %7[0, 0, 0] : f32 from vector<1x1x1xf32>
    %9 = arith.mulf %4, %4 : vector<4x64xf32>
    %10 = vector.shape_cast %9 : vector<4x64xf32> to vector<1x4x64xf32>
    %cst_3 = arith.constant dense<0.000000e+00> : vector<1xf32>
    %11 = vector.multi_reduction <add>, %10, %cst_3 [1, 2] : vector<1x4x64xf32> to vector<1xf32>
    %12 = vector.shape_cast %11 : vector<1xf32> to vector<1x1x1xf32>
    %13 = vector.extract %12[0, 0, 0] : f32 from vector<1x1x1xf32>
    %cst_4 = arith.constant 3.906250e-03 : f32
    %14 = arith.mulf %8, %cst_4 : f32
    %cst_5 = arith.constant 3.906250e-03 : f32
    %15 = arith.mulf %13, %cst_5 : f32
    %16 = arith.mulf %14, %14 : f32
    %17 = arith.subf %15, %16 : f32
    %18 = vector.broadcast %14 : f32 to vector<4x64xf32>
    %19 = arith.subf %4, %18 : vector<4x64xf32>
    %cst_6 = arith.constant 9.99999974E-6 : f32
    %20 = arith.addf %17, %cst_6 : f32
    %21 = math.rsqrt %20 : f32
    %22 = vector.broadcast %21 : f32 to vector<4x64xf32>
    %23 = arith.mulf %19, %22 : vector<4x64xf32>
    %24 = vector.extract_strided_slice %23 {offsets = [0, 0], sizes = [4, 8], strides = [1, 1]} : vector<4x64xf32> to vector<4x8xf32>
    %c0_7 = arith.constant 0 : index
    %c11 = arith.constant 11 : index
    %25 = vector.load %arg5[%c0_7, %c11] : memref<8x103xf32, #tpu.memory_space<vmem>>, vector<4x8xf32>
    tpu.vector_store %arg5[%c0_7, %c11], %24 {strides = array<i32>} : memref<8x103xf32, #tpu.memory_space<vmem>>, vector<4x8xf32>,
    %26 = vector.extract_strided_slice %23 {offsets = [0, 8], sizes = [4, 8], strides = [1, 1]} : vector<4x64xf32> to vector<4x8xf32>
    %c0_8 = arith.constant 0 : index
    %c21 = arith.constant 21 : index
    %27 = vector.load %arg5[%c0_8, %c21] : memref<8x103xf32, #tpu.memory_space<vmem>>, vector<4x8xf32>
    tpu.vector_store %arg5[%c0_8, %c21], %26 {strides = array<i32>} : memref<8x103xf32, #tpu.memory_space<vmem>>, vector<4x8xf32>,
    %28 = vector.extract_strided_slice %23 {offsets = [0, 16], sizes = [4, 8], strides = [1, 1]} : vector<4x64xf32> to vector<4x8xf32>
    %c0_9 = arith.constant 0 : index
    %c31 = arith.constant 31 : index
    %29 = vector.load %arg5[%c0_9, %c31] : memref<8x103xf32, #tpu.memory_space<vmem>>, vector<4x8xf32>
    tpu.vector_store %arg5[%c0_9, %c31], %28 {strides = array<i32>} : memref<8x103xf32, #tpu.memory_space<vmem>>, vector<4x8xf32>,
    %30 = vector.extract_strided_slice %23 {offsets = [0, 24], sizes = [4, 8], strides = [1, 1]} : vector<4x64xf32> to vector<4x8xf32>
    %c0_10 = arith.constant 0 : index
    %c41 = arith.constant 41 : index
    %31 = vector.load %arg5[%c0_10, %c41] : memref<8x103xf32, #tpu.memory_space<vmem>>, vector<4x8xf32>
    tpu.vector_store %arg5[%c0_10, %c41], %30 {strides = array<i32>} : memref<8x103xf32, #tpu.memory_space<vmem>>, vector<4x8xf32>,
    %32 = vector.extract_strided_slice %23 {offsets = [0, 32], sizes = [4, 8], strides = [1, 1]} : vector<4x64xf32> to vector<4x8xf32>
    %c0_11 = arith.constant 0 : index
    %c51 = arith.constant 51 : index
    %33 = vector.load %arg5[%c0_11, %c51] : memref<8x103xf32, #tpu.memory_space<vmem>>, vector<4x8xf32>
    tpu.vector_store %arg5[%c0_11, %c51], %32 {strides = array<i32>} : memref<8x103xf32, #tpu.memory_space<vmem>>, vector<4x8xf32>,
    %34 = vector.extract_strided_slice %23 {offsets = [0, 40], sizes = [4, 8], strides = [1, 1]} : vector<4x64xf32> to vector<4x8xf32>
    %c0_12 = arith.constant 0 : index
    %c61 = arith.constant 61 : index
    %35 = vector.load %arg5[%c0_12, %c61] : memref<8x103xf32, #tpu.memory_space<vmem>>, vector<4x8xf32>
    tpu.vector_store %arg5[%c0_12, %c61], %34 {strides = array<i32>} : memref<8x103xf32, #tpu.memory_space<vmem>>, vector<4x8xf32>,
    %36 = vector.extract_strided_slice %23 {offsets = [0, 48], sizes = [4, 8], strides = [1, 1]} : vector<4x64xf32> to vector<4x8xf32>
    %c0_13 = arith.constant 0 : index
    %c71 = arith.constant 71 : index
    %37 = vector.load %arg5[%c0_13, %c71] : memref<8x103xf32, #tpu.memory_space<vmem>>, vector<4x8xf32>
    tpu.vector_store %arg5[%c0_13, %c71], %36 {strides = array<i32>} : memref<8x103xf32, #tpu.memory_space<vmem>>, vector<4x8xf32>,
    %38 = vector.extract_strided_slice %23 {offsets = [0, 56], sizes = [4, 8], strides = [1, 1]} : vector<4x64xf32> to vector<4x8xf32>
    %c0_14 = arith.constant 0 : index
    %c81 = arith.constant 81 : index
    %39 = vector.load %arg5[%c0_14, %c81] : memref<8x103xf32, #tpu.memory_space<vmem>>, vector<4x8xf32>
    tpu.vector_store %arg5[%c0_14, %c81], %38 {strides = array<i32>} : memref<8x103xf32, #tpu.memory_space<vmem>>, vector<4x8xf32>,
    %c1 = arith.constant 1 : index
    %c0_15 = arith.constant 0 : index
    %c0_16 = arith.constant 0 : index
    %40 = vector.load %arg1[%c1, %c0_15, %c0_16] : memref<2x4x64xf32, #tpu.memory_space<vmem>>, vector<1x4x64xf32>
    %41 = vector.shape_cast %40 : vector<1x4x64xf32> to vector<4x64xf32>
    %42 = vector.shape_cast %41 : vector<4x64xf32> to vector<1x4x64xf32>
    %cst_17 = arith.constant dense<0.000000e+00> : vector<1xf32>
    %43 = vector.multi_reduction <add>, %42, %cst_17 [1, 2] : vector<1x4x64xf32> to vector<1xf32>
    %44 = vector.shape_cast %43 : vector<1xf32> to vector<1x1x1xf32>
    %45 = vector.extract %44[0, 0, 0] : f32 from vector<1x1x1xf32>
    %46 = arith.mulf %41, %41 : vector<4x64xf32>
    %47 = vector.shape_cast %46 : vector<4x64xf32> to vector<1x4x64xf32>
    %cst_18 = arith.constant dense<0.000000e+00> : vector<1xf32>
    %48 = vector.multi_reduction <add>, %47, %cst_18 [1, 2] : vector<1x4x64xf32> to vector<1xf32>
    %49 = vector.shape_cast %48 : vector<1xf32> to vector<1x1x1xf32>
    %50 = vector.extract %49[0, 0, 0] : f32 from vector<1x1x1xf32>
    %cst_19 = arith.constant 3.906250e-03 : f32
    %51 = arith.mulf %45, %cst_19 : f32
    %cst_20 = arith.constant 3.906250e-03 : f32
    %52 = arith.mulf %50, %cst_20 : f32
    %53 = arith.mulf %51, %51 : f32
    %54 = arith.subf %52, %53 : f32
    %55 = vector.broadcast %51 : f32 to vector<4x64xf32>
    %56 = arith.subf %41, %55 : vector<4x64xf32>
    %cst_21 = arith.constant 9.99999974E-6 : f32
    %57 = arith.addf %54, %cst_21 : f32
    %58 = math.rsqrt %57 : f32
    %59 = vector.broadcast %58 : f32 to vector<4x64xf32>
    %60 = arith.mulf %56, %59 : vector<4x64xf32>
    %61 = vector.extract_strided_slice %60 {offsets = [0, 0], sizes = [4, 8], strides = [1, 1]} : vector<4x64xf32> to vector<4x8xf32>
    %c4 = arith.constant 4 : index
    %c11_22 = arith.constant 11 : index
    %62 = vector.load %arg5[%c4, %c11_22] : memref<8x103xf32, #tpu.memory_space<vmem>>, vector<4x8xf32>
    tpu.vector_store %arg5[%c4, %c11_22], %61 {strides = array<i32>} : memref<8x103xf32, #tpu.memory_space<vmem>>, vector<4x8xf32>,
    %63 = vector.extract_strided_slice %60 {offsets = [0, 8], sizes = [4, 8], strides = [1, 1]} : vector<4x64xf32> to vector<4x8xf32>
    %c4_23 = arith.constant 4 : index
    %c21_24 = arith.constant 21 : index
    %64 = vector.load %arg5[%c4_23, %c21_24] : memref<8x103xf32, #tpu.memory_space<vmem>>, vector<4x8xf32>
    tpu.vector_store %arg5[%c4_23, %c21_24], %63 {strides = array<i32>} : memref<8x103xf32, #tpu.memory_space<vmem>>, vector<4x8xf32>,
    %65 = vector.extract_strided_slice %60 {offsets = [0, 16], sizes = [4, 8], strides = [1, 1]} : vector<4x64xf32> to vector<4x8xf32>
    %c4_25 = arith.constant 4 : index
    %c31_26 = arith.constant 31 : index
    %66 = vector.load %arg5[%c4_25, %c31_26] : memref<8x103xf32, #tpu.memory_space<vmem>>, vector<4x8xf32>
    tpu.vector_store %arg5[%c4_25, %c31_26], %65 {strides = array<i32>} : memref<8x103xf32, #tpu.memory_space<vmem>>, vector<4x8xf32>,
    %67 = vector.extract_strided_slice %60 {offsets = [0, 24], sizes = [4, 8], strides = [1, 1]} : vector<4x64xf32> to vector<4x8xf32>
    %c4_27 = arith.constant 4 : index
    %c41_28 = arith.constant 41 : index
    %68 = vector.load %arg5[%c4_27, %c41_28] : memref<8x103xf32, #tpu.memory_space<vmem>>, vector<4x8xf32>
    tpu.vector_store %arg5[%c4_27, %c41_28], %67 {strides = array<i32>} : memref<8x103xf32, #tpu.memory_space<vmem>>, vector<4x8xf32>,
    %69 = vector.extract_strided_slice %60 {offsets = [0, 32], sizes = [4, 8], strides = [1, 1]} : vector<4x64xf32> to vector<4x8xf32>
    %c4_29 = arith.constant 4 : index
    %c51_30 = arith.constant 51 : index
    %70 = vector.load %arg5[%c4_29, %c51_30] : memref<8x103xf32, #tpu.memory_space<vmem>>, vector<4x8xf32>
    tpu.vector_store %arg5[%c4_29, %c51_30], %69 {strides = array<i32>} : memref<8x103xf32, #tpu.memory_space<vmem>>, vector<4x8xf32>,
    %71 = vector.extract_strided_slice %60 {offsets = [0, 40], sizes = [4, 8], strides = [1, 1]} : vector<4x64xf32> to vector<4x8xf32>
    %c4_31 = arith.constant 4 : index
    %c61_32 = arith.constant 61 : index
    %72 = vector.load %arg5[%c4_31, %c61_32] : memref<8x103xf32, #tpu.memory_space<vmem>>, vector<4x8xf32>
    tpu.vector_store %arg5[%c4_31, %c61_32], %71 {strides = array<i32>} : memref<8x103xf32, #tpu.memory_space<vmem>>, vector<4x8xf32>,
    %73 = vector.extract_strided_slice %60 {offsets = [0, 48], sizes = [4, 8], strides = [1, 1]} : vector<4x64xf32> to vector<4x8xf32>
    %c4_33 = arith.constant 4 : index
    %c71_34 = arith.constant 71 : index
    %74 = vector.load %arg5[%c4_33, %c71_34] : memref<8x103xf32, #tpu.memory_space<vmem>>, vector<4x8xf32>
    tpu.vector_store %arg5[%c4_33, %c71_34], %73 {strides = array<i32>} : memref<8x103xf32, #tpu.memory_space<vmem>>, vector<4x8xf32>,
    %75 = vector.extract_strided_slice %60 {offsets = [0, 56], sizes = [4, 8], strides = [1, 1]} : vector<4x64xf32> to vector<4x8xf32>
    %c4_35 = arith.constant 4 : index
    %c81_36 = arith.constant 81 : index
    %76 = vector.load %arg5[%c4_35, %c81_36] : memref<8x103xf32, #tpu.memory_space<vmem>>, vector<4x8xf32>
    tpu.vector_store %arg5[%c4_35, %c81_36], %75 {strides = array<i32>} : memref<8x103xf32, #tpu.memory_space<vmem>>, vector<4x8xf32>,
    %c0_37 = arith.constant 0 : index
    %c0_38 = arith.constant 0 : index
    %77 = vector.load %arg3[%c0_37, %c0_38] : memref<8x1xf32, #tpu.memory_space<vmem>>, vector<8x1xf32>
    %c0_39 = arith.constant 0 : index
    %c0_40 = arith.constant 0 : index
    %78 = vector.load %arg5[%c0_39, %c0_40] : memref<8x103xf32, #tpu.memory_space<vmem>>, vector<4x80xf32>
    %c0_41 = arith.constant 0 : index
    %c0_42 = arith.constant 0 : index
    %79 = vector.load %arg6[%c0_41, %c0_42] : memref<36x160xf32, #tpu.memory_space<vmem>>, vector<4x80xf32>
    tpu.vector_store %arg6[%c0_41, %c0_42], %78 {strides = array<i32>} : memref<36x160xf32, #tpu.memory_space<vmem>>, vector<4x80xf32>,
    %c0_43 = arith.constant 0 : index
    %c1_44 = arith.constant 1 : index
    %80 = vector.load %arg5[%c0_43, %c1_44] : memref<8x103xf32, #tpu.memory_space<vmem>>, vector<4x80xf32>
    %c4_45 = arith.constant 4 : index
    %c0_46 = arith.constant 0 : index
    %81 = vector.load %arg6[%c4_45, %c0_46] : memref<36x160xf32, #tpu.memory_space<vmem>>, vector<4x80xf32>
    tpu.vector_store %arg6[%c4_45, %c0_46], %80 {strides = array<i32>} : memref<36x160xf32, #tpu.memory_space<vmem>>, vector<4x80xf32>,
    %c0_47 = arith.constant 0 : index
    %c2 = arith.constant 2 : index
    %82 = vector.load %arg5[%c0_47, %c2] : memref<8x103xf32, #tpu.memory_space<vmem>>, vector<4x80xf32>
    %c8 = arith.constant 8 : index
    %c0_48 = arith.constant 0 : index
    %83 = vector.load %arg6[%c8, %c0_48] : memref<36x160xf32, #tpu.memory_space<vmem>>, vector<4x80xf32>
    tpu.vector_store %arg6[%c8, %c0_48], %82 {strides = array<i32>} : memref<36x160xf32, #tpu.memory_space<vmem>>, vector<4x80xf32>,
    %c0_49 = arith.constant 0 : index
    %c10 = arith.constant 10 : index
    %84 = vector.load %arg5[%c0_49, %c10] : memref<8x103xf32, #tpu.memory_space<vmem>>, vector<4x80xf32>
    %c12 = arith.constant 12 : index
    %c0_50 = arith.constant 0 : index
    %85 = vector.load %arg6[%c12, %c0_50] : memref<36x160xf32, #tpu.memory_space<vmem>>, vector<4x80xf32>
    tpu.vector_store %arg6[%c12, %c0_50], %84 {strides = array<i32>} : memref<36x160xf32, #tpu.memory_space<vmem>>, vector<4x80xf32>,
    %c0_51 = arith.constant 0 : index
    %c11_52 = arith.constant 11 : index
    %86 = vector.load %arg5[%c0_51, %c11_52] : memref<8x103xf32, #tpu.memory_space<vmem>>, vector<4x80xf32>
    %c16 = arith.constant 16 : index
    %c0_53 = arith.constant 0 : index
    %87 = vector.load %arg6[%c16, %c0_53] : memref<36x160xf32, #tpu.memory_space<vmem>>, vector<4x80xf32>
    tpu.vector_store %arg6[%c16, %c0_53], %86 {strides = array<i32>} : memref<36x160xf32, #tpu.memory_space<vmem>>, vector<4x80xf32>,
    %c0_54 = arith.constant 0 : index
    %c12_55 = arith.constant 12 : index
    %88 = vector.load %arg5[%c0_54, %c12_55] : memref<8x103xf32, #tpu.memory_space<vmem>>, vector<4x80xf32>
    %c20 = arith.constant 20 : index
    %c0_56 = arith.constant 0 : index
    %89 = vector.load %arg6[%c20, %c0_56] : memref<36x160xf32, #tpu.memory_space<vmem>>, vector<4x80xf32>
    tpu.vector_store %arg6[%c20, %c0_56], %88 {strides = array<i32>} : memref<36x160xf32, #tpu.memory_space<vmem>>, vector<4x80xf32>,
    %c0_57 = arith.constant 0 : index
    %c20_58 = arith.constant 20 : index
    %90 = vector.load %arg5[%c0_57, %c20_58] : memref<8x103xf32, #tpu.memory_space<vmem>>, vector<4x80xf32>
    %c24 = arith.constant 24 : index
    %c0_59 = arith.constant 0 : index
    %91 = vector.load %arg6[%c24, %c0_59] : memref<36x160xf32, #tpu.memory_space<vmem>>, vector<4x80xf32>
    tpu.vector_store %arg6[%c24, %c0_59], %90 {strides = array<i32>} : memref<36x160xf32, #tpu.memory_space<vmem>>, vector<4x80xf32>,
    %c0_60 = arith.constant 0 : index
    %c21_61 = arith.constant 21 : index
    %92 = vector.load %arg5[%c0_60, %c21_61] : memref<8x103xf32, #tpu.memory_space<vmem>>, vector<4x80xf32>
    %c28 = arith.constant 28 : index
    %c0_62 = arith.constant 0 : index
    %93 = vector.load %arg6[%c28, %c0_62] : memref<36x160xf32, #tpu.memory_space<vmem>>, vector<4x80xf32>
    tpu.vector_store %arg6[%c28, %c0_62], %92 {strides = array<i32>} : memref<36x160xf32, #tpu.memory_space<vmem>>, vector<4x80xf32>,
    %c0_63 = arith.constant 0 : index
    %c22 = arith.constant 22 : index
    %94 = vector.load %arg5[%c0_63, %c22] : memref<8x103xf32, #tpu.memory_space<vmem>>, vector<4x80xf32>
    %c32 = arith.constant 32 : index
    %c0_64 = arith.constant 0 : index
    %95 = vector.load %arg6[%c32, %c0_64] : memref<36x160xf32, #tpu.memory_space<vmem>>, vector<4x80xf32>
    tpu.vector_store %arg6[%c32, %c0_64], %94 {strides = array<i32>} : memref<36x160xf32, #tpu.memory_space<vmem>>, vector<4x80xf32>,
    %c4_65 = arith.constant 4 : index
    %c0_66 = arith.constant 0 : index
    %96 = vector.load %arg5[%c4_65, %c0_66] : memref<8x103xf32, #tpu.memory_space<vmem>>, vector<4x80xf32>
    %c0_67 = arith.constant 0 : index
    %c80 = arith.constant 80 : index
    %97 = vector.load %arg6[%c0_67, %c80] : memref<36x160xf32, #tpu.memory_space<vmem>>, vector<4x80xf32>
    tpu.vector_store %arg6[%c0_67, %c80], %96 {strides = array<i32>} : memref<36x160xf32, #tpu.memory_space<vmem>>, vector<4x80xf32>,
    %c4_68 = arith.constant 4 : index
    %c1_69 = arith.constant 1 : index
    %98 = vector.load %arg5[%c4_68, %c1_69] : memref<8x103xf32, #tpu.memory_space<vmem>>, vector<4x80xf32>
    %c4_70 = arith.constant 4 : index
    %c80_71 = arith.constant 80 : index
    %99 = vector.load %arg6[%c4_70, %c80_71] : memref<36x160xf32, #tpu.memory_space<vmem>>, vector<4x80xf32>
    tpu.vector_store %arg6[%c4_70, %c80_71], %98 {strides = array<i32>} : memref<36x160xf32, #tpu.memory_space<vmem>>, vector<4x80xf32>,
    %c4_72 = arith.constant 4 : index
    %c2_73 = arith.constant 2 : index
    %100 = vector.load %arg5[%c4_72, %c2_73] : memref<8x103xf32, #tpu.memory_space<vmem>>, vector<4x80xf32>
    %c8_74 = arith.constant 8 : index
    %c80_75 = arith.constant 80 : index
    %101 = vector.load %arg6[%c8_74, %c80_75] : memref<36x160xf32, #tpu.memory_space<vmem>>, vector<4x80xf32>
    tpu.vector_store %arg6[%c8_74, %c80_75], %100 {strides = array<i32>} : memref<36x160xf32, #tpu.memory_space<vmem>>, vector<4x80xf32>,
    %c4_76 = arith.constant 4 : index
    %c10_77 = arith.constant 10 : index
    %102 = vector.load %arg5[%c4_76, %c10_77] : memref<8x103xf32, #tpu.memory_space<vmem>>, vector<4x80xf32>
    %c12_78 = arith.constant 12 : index
    %c80_79 = arith.constant 80 : index
    %103 = vector.load %arg6[%c12_78, %c80_79] : memref<36x160xf32, #tpu.memory_space<vmem>>, vector<4x80xf32>
    tpu.vector_store %arg6[%c12_78, %c80_79], %102 {strides = array<i32>} : memref<36x160xf32, #tpu.memory_space<vmem>>, vector<4x80xf32>,
    %c4_80 = arith.constant 4 : index
    %c11_81 = arith.constant 11 : index
    %104 = vector.load %arg5[%c4_80, %c11_81] : memref<8x103xf32, #tpu.memory_space<vmem>>, vector<4x80xf32>
    %c16_82 = arith.constant 16 : index
    %c80_83 = arith.constant 80 : index
    %105 = vector.load %arg6[%c16_82, %c80_83] : memref<36x160xf32, #tpu.memory_space<vmem>>, vector<4x80xf32>
    tpu.vector_store %arg6[%c16_82, %c80_83], %104 {strides = array<i32>} : memref<36x160xf32, #tpu.memory_space<vmem>>, vector<4x80xf32>,
    %c4_84 = arith.constant 4 : index
    %c12_85 = arith.constant 12 : index
    %106 = vector.load %arg5[%c4_84, %c12_85] : memref<8x103xf32, #tpu.memory_space<vmem>>, vector<4x80xf32>
    %c20_86 = arith.constant 20 : index
    %c80_87 = arith.constant 80 : index
    %107 = vector.load %arg6[%c20_86, %c80_87] : memref<36x160xf32, #tpu.memory_space<vmem>>, vector<4x80xf32>
    tpu.vector_store %arg6[%c20_86, %c80_87], %106 {strides = array<i32>} : memref<36x160xf32, #tpu.memory_space<vmem>>, vector<4x80xf32>,
    %c4_88 = arith.constant 4 : index
    %c20_89 = arith.constant 20 : index
    %108 = vector.load %arg5[%c4_88, %c20_89] : memref<8x103xf32, #tpu.memory_space<vmem>>, vector<4x80xf32>
    %c24_90 = arith.constant 24 : index
    %c80_91 = arith.constant 80 : index
    %109 = vector.load %arg6[%c24_90, %c80_91] : memref<36x160xf32, #tpu.memory_space<vmem>>, vector<4x80xf32>
    tpu.vector_store %arg6[%c24_90, %c80_91], %108 {strides = array<i32>} : memref<36x160xf32, #tpu.memory_space<vmem>>, vector<4x80xf32>,
    %c4_92 = arith.constant 4 : index
    %c21_93 = arith.constant 21 : index
    %110 = vector.load %arg5[%c4_92, %c21_93] : memref<8x103xf32, #tpu.memory_space<vmem>>, vector<4x80xf32>
    %c28_94 = arith.constant 28 : index
    %c80_95 = arith.constant 80 : index
    %111 = vector.load %arg6[%c28_94, %c80_95] : memref<36x160xf32, #tpu.memory_space<vmem>>, vector<4x80xf32>
    tpu.vector_store %arg6[%c28_94, %c80_95], %110 {strides = array<i32>} : memref<36x160xf32, #tpu.memory_space<vmem>>, vector<4x80xf32>,
    %c4_96 = arith.constant 4 : index
    %c22_97 = arith.constant 22 : index
    %112 = vector.load %arg5[%c4_96, %c22_97] : memref<8x103xf32, #tpu.memory_space<vmem>>, vector<4x80xf32>
    %c32_98 = arith.constant 32 : index
    %c80_99 = arith.constant 80 : index
    %113 = vector.load %arg6[%c32_98, %c80_99] : memref<36x160xf32, #tpu.memory_space<vmem>>, vector<4x80xf32>
    tpu.vector_store %arg6[%c32_98, %c80_99], %112 {strides = array<i32>} : memref<36x160xf32, #tpu.memory_space<vmem>>, vector<4x80xf32>,
    %c0_100 = arith.constant 0 : index
    %c0_101 = arith.constant 0 : index
    %114 = vector.load %arg2[%c0_100, %c0_101] : memref<8x36xf32, #tpu.memory_space<vmem>>, vector<8x36xf32>
    %c0_102 = arith.constant 0 : index
    %c0_103 = arith.constant 0 : index
    %115 = vector.load %arg6[%c0_102, %c0_103] : memref<36x160xf32, #tpu.memory_space<vmem>>, vector<36x160xf32>
    %cst_104 = arith.constant dense<0.000000e+00> : vector<8x160xf32>
    %116 = tpu.matmul %114, %115, %cst_104 {dimension_numbers = #tpu.dot_dimension_numbers<[1], [0], [0], [1], [0, 0, 1, 1], [], []>} : vector<8x36xf32>, vector<36x160xf32>, vector<8x160xf32> -> vector<8x160xf32>
    %117 = vector.broadcast %77 : vector<8x1xf32> to vector<8x160xf32>
    %118 = arith.addf %116, %117 : vector<8x160xf32>
    %cst_105 = arith.constant 0.000000e+00 : f32
    %119 = vector.broadcast %cst_105 : f32 to vector<8x160xf32>
    %120 = arith.maximumf %118, %119 : vector<8x160xf32>
    %121 = vector.extract_strided_slice %120 {offsets = [0, 0], sizes = [8, 80], strides = [1, 1]} : vector<8x160xf32> to vector<8x80xf32>
    %c0_106 = arith.constant 0 : index
    %c0_107 = arith.constant 0 : index
    %c0_108 = arith.constant 0 : index
    %122 = vector.load %arg4[%c0_106, %c0_107, %c0_108] : memref<2x8x80xf32, #tpu.memory_space<vmem>>, vector<1x8x80xf32>
    %123 = vector.shape_cast %122 : vector<1x8x80xf32> to vector<8x80xf32>
    %124 = vector.shape_cast %121 : vector<8x80xf32> to vector<1x8x80xf32>
    tpu.vector_store %arg4[%c0_106, %c0_107, %c0_108], %124 {strides = array<i32>} : memref<2x8x80xf32, #tpu.memory_space<vmem>>, vector<1x8x80xf32>,
    %125 = vector.extract_strided_slice %120 {offsets = [0, 80], sizes = [8, 80], strides = [1, 1]} : vector<8x160xf32> to vector<8x80xf32>
    %c1_109 = arith.constant 1 : index
    %c0_110 = arith.constant 0 : index
    %c0_111 = arith.constant 0 : index
    %126 = vector.load %arg4[%c1_109, %c0_110, %c0_111] : memref<2x8x80xf32, #tpu.memory_space<vmem>>, vector<1x8x80xf32>
    %127 = vector.shape_cast %126 : vector<1x8x80xf32> to vector<8x80xf32>
    %128 = vector.shape_cast %125 : vector<8x80xf32> to vector<1x8x80xf32>
    tpu.vector_store %arg4[%c1_109, %c0_110, %c0_111], %128 {strides = array<i32>} : memref<2x8x80xf32, #tpu.memory_space<vmem>>, vector<1x8x80xf32>,
    return
  }
  func.func @transform_0(%arg0: i32) -> (i32, i32, i32) {
    %c0_i32 = arith.constant 0 : i32
    %c0_i32_0 = arith.constant 0 : i32
    %c0_i32_1 = arith.constant 0 : i32
    return %arg0, %c0_i32, %c0_i32_0 : i32, i32, i32
  }
  func.func @transform_1(%arg0: i32) -> (i32, i32) {
    %c0_i32 = arith.constant 0 : i32
    %c0_i32_0 = arith.constant 0 : i32
    %c0_i32_1 = arith.constant 0 : i32
    return %c0_i32, %c0_i32_0 : i32, i32
  }
  func.func @transform_2(%arg0: i32) -> (i32, i32) {
    %c0_i32 = arith.constant 0 : i32
    %c0_i32_0 = arith.constant 0 : i32
    %c0_i32_1 = arith.constant 0 : i32
    return %c0_i32, %c0_i32_0 : i32, i32
  }
  func.func @transform_3(%arg0: i32) -> (i32, i32, i32) {
    %c0_i32 = arith.constant 0 : i32
    %c0_i32_0 = arith.constant 0 : i32
    %c0_i32_1 = arith.constant 0 : i32
    return %arg0, %c0_i32, %c0_i32_0 : i32, i32, i32
  }
}

</mosaic_0001>

<llo_original>
// kernel: tpu_custom_call.1
$region0: #{tpu_custom_call.1}
  #allocation0 [shape = 'u32[]', space=smem, size = 0x4, offset = 0x4, fixed_abs, tag = 'smem constant byte address 0x4 - core index']
  #allocation1 [shape = 'u32[144,128]{1,0:T(1,128)}', space=vmem, size = 0x12000, scoped, tag = 'internal scratch']
  #allocation2 [shape = 'f32[8,103]{1,0:T(8,128)}', space=vmem, size = 0x1000, scoped, tag = 'scratch operand']
  #allocation3 [shape = 'f32[36,160]{1,0:T(8,128)}', space=vmem, size = 0xa000, scoped, tag = 'scratch operand']
  %s0 = inlined_call_operand.vmem [shape: f32[2,4,64], index: 0, kind: input, shape index: {}]
  %s1 = inlined_call_operand.hbm [shape: f32[8,36], index: 1, kind: input, shape index: {}]
  %s2 = inlined_call_operand.vmem [shape: f32[8,1], index: 2, kind: input, shape index: {}]
  %s3 = inlined_call_operand.hbm [shape: f32[2,8,80], index: 3, kind: output, shape index: {}]
  %s4 = sld [smem:[#allocation0]]
  $region30: #{tpu_custom_call.1} parent=0
    _
  %s6 = ssub.s32 1, %s4
  %s7 = scalar_select 0, %s6, %s4
  $region1: #{tpu_custom_call.1} parent=0
    #allocation4 [shape = 'u8[4096]{0}', space=vmem, size = 0x1000, scoped, tag = 'input window, operand 1, single buffered']
    #allocation5 [shape = 's32[1]{0}', space=sflag, size = 0x4, scoped, tag = 'scoped memory for tpu_custom_call.1']
    #allocation6 [shape = 's32[1]{0}', space=sflag, size = 0x4, scoped, tag = 'scoped memory for tpu_custom_call.1']
    #allocation7 [shape = 'u8[8192]{0}', space=vmem, size = 0x2000, scoped, tag = 'output window, operand 0, single buffered']
    %8 = vsyncpa [#allocation5], 0
    %9 = vsyncpa [#allocation6], 0
    // Predicated region
    $region2: #{tpu_custom_call.1} parent=1 // pred_check
      _
    $region3: #{tpu_custom_call.1} parent=1 // pred_check_branch
      %11 = sbr.rel (0) target = $region5
    $region4: #{tpu_custom_call.1} parent=1 // pred_region
      _
    $region5: #{tpu_custom_call.1} parent=1 // pred_fallthru
      _
    // Predicated region
    $region6: #{tpu_custom_call.1} parent=1 // pred_check
      _
    $region7: #{tpu_custom_call.1} parent=1 // pred_check_branch
      %13 = sbr.rel (0) target = $region9
    $region8: #{tpu_custom_call.1} parent=1 // pred_region
      %s15 = ssub.s32 128, 128
      %16 = vsyncadd [#allocation5], %s15
      %s18 = sshll.u32 [#allocation4], 4
      %s19 = int_to_ptr.vmem [resolvable:$true] %s18
      %21 = dma.hbm_to_vmem [thread:$0]  %s1, 128, %s19, [#allocation5]
    $region9: #{tpu_custom_call.1} parent=1 // pred_fallthru
      _
    // Predicated region
    $region10: #{tpu_custom_call.1} parent=1 // pred_check
      _
    $region11: #{tpu_custom_call.1} parent=1 // pred_check_branch
      %23 = sbr.rel (0) target = $region13
    $region12: #{tpu_custom_call.1} parent=1 // pred_region
      _
    $region13: #{tpu_custom_call.1} parent=1 // pred_fallthru
      _
    // Predicated region
    $region14: #{tpu_custom_call.1} parent=1 // pred_check
      _
    $region15: #{tpu_custom_call.1} parent=1 // pred_check_branch
      %25 = sbr.rel (0) target = $region17
    $region16: #{tpu_custom_call.1} parent=1 // pred_region
      %26 = dma.done [#allocation5], 128
    $region17: #{tpu_custom_call.1} parent=1 // pred_fallthru
      _
    %p27 = scmp.eq.s32.totalorder 0, 0
    // Predicated region
    $region18: #{tpu_custom_call.1} parent=1 // pred_check
      %p28 = pneg %p27
    $region19: #{tpu_custom_call.1} parent=1 // pred_check_branch
      %30 = sbr.rel (%p28) target = $region21
    $region20: #{tpu_custom_call.1} parent=1 // pred_region
      %vm31 = vcmask 842752
      %32 = vst.msk [vmem:[#allocation2] sm:$0xff] %vm31, 0.0
    $region21: #{tpu_custom_call.1} parent=1 // pred_fallthru
      _
    %v33 = vld [vmem:[%s0] sm:$0xf]
    %vm34 = vcmask 519168
    %v35 = vsel %vm34, %v33, 0.0
    %36 = vadd.xlane.f32.xlu0 %v35
    %v37 = vpop.xlane.xlu0 %36
    %v38 = vrot.slane %v37, 4
    %v39 = vadd.f32 %v37, %v38
    %v40 = vrot.slane %v39, 2
    %v41 = vadd.f32 %v39, %v40
    %v42 = vrot.slane %v41, 1
    %v43 = vadd.f32 %v41, %v42
    %s44 = vtos %v43
    %v45 = vmul.f32 %v33, %v33
    %v46 = vsel %vm34, %v45, 0.0
    %47 = vadd.xlane.f32.xlu0 %v46
    %v48 = vpop.xlane.xlu0 %47
    %v49 = vrot.slane %v48, 4
    %v50 = vadd.f32 %v48, %v49
    %v51 = vrot.slane %v50, 2
    %v52 = vadd.f32 %v50, %v51
    %v53 = vrot.slane %v52, 1
    %v54 = vadd.f32 %v52, %v53
    %s55 = vtos %v54
    %s56 = smul.f32 %s44, 0.00390625
    %s57 = smul.f32 %s55, 0.00390625
    %s58 = smul.f32 %s56, %s56
    %s59 = ssub.f32 %s57, %s58
    %v60 = vstv %s56
    %v61 = vsub.f32 %v33, %v60
    %s62 = sadd.f32 %s59, 1e-05
    %v63 = vstv %s62
    %v64 = vrsqrt.pop %v63
    %s65 = vtos %v64
    %v66 = vstv %s65
    %v67 = vmul.f32 %v61, %v66
    %69 = vrot.lane.b32.xlu0 %v67, 11
    %v70 = vpop.permute.xlu0 %69
    %vm72 = vcmask 150616
    %73 = vst.msk [vmem:[#allocation2] sm:$0xf] %vm72, %v70
    %74 = vrot.lane.b32.xlu0 %v67, 13
    %v75 = vpop.permute.xlu0 %74
    %vm77 = vcmask 232616
    %78 = vst.msk [vmem:[#allocation2] sm:$0xf] %vm77, %v75
    %79 = vrot.lane.b32.xlu0 %v67, 15
    %v80 = vpop.permute.xlu0 %79
    %vm82 = vcmask 314616
    %83 = vst.msk [vmem:[#allocation2] sm:$0xf] %vm82, %v80
    %84 = vrot.lane.b32.xlu0 %v67, 17
    %v85 = vpop.permute.xlu0 %84
    %vm87 = vcmask 396616
    %88 = vst.msk [vmem:[#allocation2] sm:$0xf] %vm87, %v85
    %89 = vrot.lane.b32.xlu0 %v67, 19
    %v90 = vpop.permute.xlu0 %89
    %vm92 = vcmask 478616
    %93 = vst.msk [vmem:[#allocation2] sm:$0xf] %vm92, %v90
    %94 = vrot.lane.b32.xlu0 %v67, 21
    %v95 = vpop.permute.xlu0 %94
    %vm97 = vcmask 560616
    %98 = vst.msk [vmem:[#allocation2] sm:$0xf] %vm97, %v95
    %99 = vrot.lane.b32.xlu0 %v67, 23
    %v100 = vpop.permute.xlu0 %99
    %vm102 = vcmask 642616
    %103 = vst.msk [vmem:[#allocation2] sm:$0xf] %vm102, %v100
    %104 = vrot.lane.b32.xlu0 %v67, 25
    %v105 = vpop.permute.xlu0 %104
    %vm107 = vcmask 724616
    %108 = vst.msk [vmem:[#allocation2] sm:$0xf] %vm107, %v105
    %s109 = scalar_lea.vmem %s0, 4
    %v110 = vld [vmem:[%s109] sm:$0xf]
    %v111 = vsel %vm34, %v110, 0.0
    %112 = vadd.xlane.f32.xlu0 %v111
    %v113 = vpop.xlane.xlu0 %112
    %v114 = vrot.slane %v113, 4
    %v115 = vadd.f32 %v113, %v114
    %v116 = vrot.slane %v115, 2
    %v117 = vadd.f32 %v115, %v116
    %v118 = vrot.slane %v117, 1
    %v119 = vadd.f32 %v117, %v118
    %s120 = vtos %v119
    %v121 = vmul.f32 %v110, %v110
    %v122 = vsel %vm34, %v121, 0.0
    %123 = vadd.xlane.f32.xlu0 %v122
    %v124 = vpop.xlane.xlu0 %123
    %v125 = vrot.slane %v124, 4
    %v126 = vadd.f32 %v124, %v125
    %v127 = vrot.slane %v126, 2
    %v128 = vadd.f32 %v126, %v127
    %v129 = vrot.slane %v128, 1
    %v130 = vadd.f32 %v128, %v129
    %s131 = vtos %v130
    %s132 = smul.f32 %s120, 0.00390625
    %s133 = smul.f32 %s131, 0.00390625
    %s134 = smul.f32 %s132, %s132
    %s135 = ssub.f32 %s133, %s134
    %v136 = vstv %s132
    %v137 = vsub.f32 %v110, %v136
    %s138 = sadd.f32 %s135, 1e-05
    %v139 = vstv %s138
    %v140 = vrsqrt.pop %v139
    %s141 = vtos %v140
    %v142 = vstv %s141
    %v143 = vmul.f32 %v137, %v142
    %145 = vrot.lane.b32.xlu0 %v143, 11
    %v146 = vpop.permute.xlu0 %145
    %148 = vst.msk [vmem:[#allocation2 + $0x4] sm:$0xf] %vm72, %v146
    %149 = vrot.lane.b32.xlu0 %v143, 13
    %v150 = vpop.permute.xlu0 %149
    %152 = vst.msk [vmem:[#allocation2 + $0x4] sm:$0xf] %vm77, %v150
    %153 = vrot.lane.b32.xlu0 %v143, 15
    %v154 = vpop.permute.xlu0 %153
    %156 = vst.msk [vmem:[#allocation2 + $0x4] sm:$0xf] %vm82, %v154
    %157 = vrot.lane.b32.xlu0 %v143, 17
    %v158 = vpop.permute.xlu0 %157
    %160 = vst.msk [vmem:[#allocation2 + $0x4] sm:$0xf] %vm87, %v158
    %161 = vrot.lane.b32.xlu0 %v143, 19
    %v162 = vpop.permute.xlu0 %161
    %164 = vst.msk [vmem:[#allocation2 + $0x4] sm:$0xf] %vm92, %v162
    %165 = vrot.lane.b32.xlu0 %v143, 21
    %v166 = vpop.permute.xlu0 %165
    %168 = vst.msk [vmem:[#allocation2 + $0x4] sm:$0xf] %vm97, %v166
    %169 = vrot.lane.b32.xlu0 %v143, 23
    %v170 = vpop.permute.xlu0 %169
    %172 = vst.msk [vmem:[#allocation2 + $0x4] sm:$0xf] %vm102, %v170
    %173 = vrot.lane.b32.xlu0 %v143, 25
    %v174 = vpop.permute.xlu0 %173
    %176 = vst.msk [vmem:[#allocation2 + $0x4] sm:$0xf] %vm107, %v174
    %v177 = vld [vmem:[%s2] sm:$0xff]
    %v178 = vld [vmem:[#allocation2] sm:$0xf]
    %vm179 = vcmask 650240
    %180 = vst.msk [vmem:[#allocation3] sm:$0xf] %vm179, %v178
    %v181 = vld [vmem:[#allocation2] sm:$0xf]
    %v183 = vrot.slane %v181, 4
    %184 = vrot.lane.b32.xlu0 %v183, 127
    %v185 = vpop.permute.xlu0 %184
    %vm187 = vcmask 654340
    %188 = vst.msk [vmem:[#allocation3] sm:$0xf0] %vm187, %v185
    %v189 = vld [vmem:[#allocation2] sm:$0xf]
    %191 = vrot.lane.b32.xlu0 %v189, 126
    %v192 = vpop.permute.xlu0 %191
    %194 = vst.msk [vmem:[#allocation3 + $0x10] sm:$0xf] %vm179, %v192
    %v195 = vld [vmem:[#allocation2] sm:$0xf]
    %v197 = vrot.slane %v195, 4
    %198 = vrot.lane.b32.xlu0 %v197, 118
    %v199 = vpop.permute.xlu0 %198
    %201 = vst.msk [vmem:[#allocation3 + $0x10] sm:$0xf0] %vm187, %v199
    %v202 = vld [vmem:[#allocation2] sm:$0xf]
    %204 = vrot.lane.b32.xlu0 %v202, 117
    %v205 = vpop.permute.xlu0 %204
    %207 = vst.msk [vmem:[#allocation3 + $0x20] sm:$0xf] %vm179, %v205
    %v208 = vld [vmem:[#allocation2] sm:$0xf]
    %v210 = vrot.slane %v208, 4
    %211 = vrot.lane.b32.xlu0 %v210, 116
    %v212 = vpop.permute.xlu0 %211
    %214 = vst.msk [vmem:[#allocation3 + $0x20] sm:$0xf0] %vm187, %v212
    %v215 = vld [vmem:[#allocation2] sm:$0xf]
    %217 = vrot.lane.b32.xlu0 %v215, 108
    %v218 = vpop.permute.xlu0 %217
    %220 = vst.msk [vmem:[#allocation3 + $0x30] sm:$0xf] %vm179, %v218
    %v221 = vld [vmem:[#allocation2] sm:$0xf]
    %v223 = vrot.slane %v221, 4
    %224 = vrot.lane.b32.xlu0 %v223, 107
    %v225 = vpop.permute.xlu0 %224
    %227 = vst.msk [vmem:[#allocation3 + $0x30] sm:$0xf0] %vm187, %v225
    %v228 = vld [vmem:[#allocation2] sm:$0xf]
    %230 = vrot.lane.b32.xlu0 %v228, 106
    %v231 = vpop.permute.xlu0 %230
    %233 = vst.msk [vmem:[#allocation3 + $0x40] sm:$0xf] %vm179, %v231
    %v234 = vld [vmem:[#allocation2 + $0x4] sm:$0xf]
    %236 = vrot.lane.b32.xlu0 %v234, 80
    %v237 = vpop.permute.xlu0 %236
    %vm239 = vcmask 1044096
    %240 = vst.msk [vmem:[#allocation3] sm:$0xf] %vm239, %v237
    %vm241 = vcmask 257024
    %242 = vst.msk [vmem:[#allocation3 + $0x8] sm:$0xf] %vm241, %v237
    %v243 = vld [vmem:[#allocation2 + $0x4] sm:$0xf]
    %v245 = vrot.slane %v243, 4
    %246 = vrot.lane.b32.xlu0 %v245, 79
    %v247 = vpop.permute.xlu0 %246
    %vm249 = vcmask 1048196
    %250 = vst.msk [vmem:[#allocation3] sm:$0xf0] %vm249, %v247
    %vm251 = vcmask 261124
    %252 = vst.msk [vmem:[#allocation3 + $0x8] sm:$0xf0] %vm251, %v247
    %v253 = vld [vmem:[#allocation2 + $0x4] sm:$0xf]
    %255 = vrot.lane.b32.xlu0 %v253, 78
    %v256 = vpop.permute.xlu0 %255
    %258 = vst.msk [vmem:[#allocation3 + $0x10] sm:$0xf] %vm239, %v256
    %259 = vst.msk [vmem:[#allocation3 + $0x18] sm:$0xf] %vm241, %v256
    %v260 = vld [vmem:[#allocation2 + $0x4] sm:$0xf]
    %v262 = vrot.slane %v260, 4
    %263 = vrot.lane.b32.xlu0 %v262, 70
    %v264 = vpop.permute.xlu0 %263
    %266 = vst.msk [vmem:[#allocation3 + $0x10] sm:$0xf0] %vm249, %v264
    %267 = vst.msk [vmem:[#allocation3 + $0x18] sm:$0xf0] %vm251, %v264
    %v268 = vld [vmem:[#allocation2 + $0x4] sm:$0xf]
    %270 = vrot.lane.b32.xlu0 %v268, 69
    %v271 = vpop.permute.xlu0 %270
    %273 = vst.msk [vmem:[#allocation3 + $0x20] sm:$0xf] %vm239, %v271
    %274 = vst.msk [vmem:[#allocation3 + $0x28] sm:$0xf] %vm241, %v271
    %v275 = vld [vmem:[#allocation2 + $0x4] sm:$0xf]
    %v277 = vrot.slane %v275, 4
    %278 = vrot.lane.b32.xlu0 %v277, 68
    %v279 = vpop.permute.xlu0 %278
    %281 = vst.msk [vmem:[#allocation3 + $0x20] sm:$0xf0] %vm249, %v279
    %282 = vst.msk [vmem:[#allocation3 + $0x28] sm:$0xf0] %vm251, %v279
    %v283 = vld [vmem:[#allocation2 + $0x4] sm:$0xf]
    %285 = vrot.lane.b32.xlu0 %v283, 60
    %v286 = vpop.permute.xlu0 %285
    %288 = vst.msk [vmem:[#allocation3 + $0x30] sm:$0xf] %vm239, %v286
    %289 = vst.msk [vmem:[#allocation3 + $0x38] sm:$0xf] %vm241, %v286
    %v290 = vld [vmem:[#allocation2 + $0x4] sm:$0xf]
    %v292 = vrot.slane %v290, 4
    %293 = vrot.lane.b32.xlu0 %v292, 59
    %v294 = vpop.permute.xlu0 %293
    %296 = vst.msk [vmem:[#allocation3 + $0x30] sm:$0xf0] %vm249, %v294
    %297 = vst.msk [vmem:[#allocation3 + $0x38] sm:$0xf0] %vm251, %v294
    %v298 = vld [vmem:[#allocation2 + $0x4] sm:$0xf]
    %300 = vrot.lane.b32.xlu0 %v298, 58
    %v301 = vpop.permute.xlu0 %300
    %303 = vst.msk [vmem:[#allocation3 + $0x40] sm:$0xf] %vm239, %v301
    %304 = vst.msk [vmem:[#allocation3 + $0x48] sm:$0xf] %vm241, %v301
    %v305 = vld [vmem:[#allocation4] sm:$0xff]
    %v306 = vld [vmem:[#allocation3] sm:$0xff]
    %v307 = vld [vmem:[#allocation3 + $0x8] sm:$0xff]
    %v308 = vld [vmem:[#allocation3 + $0x10] sm:$0xff]
    %v309 = vld [vmem:[#allocation3 + $0x18] sm:$0xff]
    %v310 = vld [vmem:[#allocation3 + $0x20] sm:$0xff]
    %v311 = vld [vmem:[#allocation3 + $0x28] sm:$0xff]
    %v312 = vld [vmem:[#allocation3 + $0x30] sm:$0xff]
    %v313 = vld [vmem:[#allocation3 + $0x38] sm:$0xff]
    %v314 = vld [vmem:[#allocation3 + $0x40] sm:$0xf]
    %v315 = vld [vmem:[#allocation3 + $0x48] sm:$0xf]
    %317 = vset.pattern.permute.xlu0 0
    %318 = vperm.xlu0 %317, %v177
    %v319 = vpop.permute.xlu0 %318
    %vm321 = vcmask 293888
    %v323 = vsel %vm321, %v305, 0
    %vm325 = vcmask 1043456
    %v327 = vsel %vm325, %v314, 0
    %v330 = vsel %vm325, %v315, 0
    %332 = vmatprep.subr.mxu0 %v307
    %333 = vmatpush1.msra.mxu0 %v306
    %334 = vmatprep.subr.mxu0 %v309
    %335 = vmatpush1.msra.mxu0 %v308
    %336 = vmatprep.subr.mxu0 %v311
    %337 = vmatpush1.msra.mxu0 %v310
    %338 = vmatprep.subr.mxu0 %v313
    %339 = vmatpush1.msra.mxu0 %v312
    %340 = vmatprep.subr.mxu0 %v330
    %341 = vmatpush1.msra.mxu0 %v327
    %342 = vmatprep.subr.mxu0 0.0
    %343 = vmatpush1.msra.mxu0 0.0
    %344 = vmatprep.subr.mxu0 0.0
    %345 = vmatpush1.msra.mxu0 0.0
    %346 = vmatprep.subr.mxu0 0.0
    %347 = vmatpush1.msra.mxu0 0.0
    %348 = vmatprep.subr.mxu0 0.0
    %349 = vmatpush1.msra.mxu0 0.0
    %350 = vmatprep.subr.mxu0 0.0
    %351 = vmatpush1.msra.mxu0 0.0
    %352 = vmatprep.subr.mxu0 0.0
    %353 = vmatpush1.msra.mxu0 0.0
    %354 = vmatprep.subr.mxu0 0.0
    %355 = vmatpush1.msra.mxu0 0.0
    %356 = vmatprep.subr.mxu0 0.0
    %357 = vmatpush1.msra.mxu0 0.0
    %358 = vmatprep.subr.mxu0 0.0
    %359 = vmatpush1.msra.mxu0 0.0
    %360 = vmatprep.subr.mxu0 0.0
    %361 = vmatpush1.msra.mxu0 0.0
    %362 = vmatprep.subr.mxu0 0.0
    %363 = vmatpush1.msra.mxu0 0.0
    %364 = vmatprep.subr.mxu0 0.0
    %365 = vmatpush1.msra.mxu0 0.0
    %366 = vmatprep.subr.mxu0 0.0
    %367 = vmatpush1.msra.mxu0 0.0
    %368 = vmatprep.subr.mxu0 0.0
    %369 = vmatpush1.msra.mxu0 0.0
    %370 = vmatprep.subr.mxu0 0.0
    %371 = vmatpush1.msra.mxu0 0.0
    %372 = vmatprep.subr.mxu0 0.0
    %373 = vmatpush1.msra.mxu0 0.0
    %374 = vmatprep.subr.mxu0 0.0
    %375 = vmatpush1.msra.mxu0 0.0
    %376 = vmatprep.subr.mxu0 0.0
    %377 = vmatpush1.msra.mxu0 0.0
    %378 = vmatprep.subr.mxu0 0.0
    %379 = vmatpush1.msra.mxu0 0.0
    %380 = vmatprep.subr.mxu0 0.0
    %381 = vmatpush1.msra.mxu0 0.0
    %382 = vmatprep.subr.mxu0 0.0
    %383 = vmatpush1.msra.mxu0 0.0
    %384 = vmatprep.subr.mxu0 0.0
    %385 = vmatpush1.msra.mxu0 0.0
    %386 = vmatprep.subr.mxu0 0.0
    %387 = vmatpush1.msra.mxu0 0.0
    %388 = vmatprep.subr.mxu0 0.0
    %389 = vmatpush1.msra.mxu0 0.0
    %390 = vmatprep.subr.mxu0 0.0
    %391 = vmatpush1.msra.mxu0 0.0
    %392 = vmatprep.subr.mxu0 0.0
    %393 = vmatpush1.msra.mxu0 0.0
    %394 = vmatprep.subr.mxu0 0.0
    %395 = vmatpush1.msra.mxu0 0.0
    %396 = vmatprep.mubr.f32.mxu0 0.0
    %397 = vmatmul.mubr.f32.gmra.mrb[0].mxu0 %v323
    %v398 = vpop.f32.mrb[0].mxu0
    %v399 = vadd.f32 %v319, %v398
    %v400 = vpop.f32.mrb[0].mxu0
    %v401 = vadd.f32 %v319, %v400
    %402 = vdwg.mxu0
    %v403 = vmax.f32 %v399, 0.0
    %v404 = vmax.f32 %v401, 0.0
    %vm405 = vcmask 654336
    %406 = vst.msk [vmem:[#allocation7] sm:$0xff] %vm405, %v403
    %409 = vrot.lane.b32.xlu0 %v403, 48
    %v410 = vpop.permute.xlu0 %409
    %411 = vrot.lane.b32.xlu0 %v404, 48
    %v412 = vpop.permute.xlu0 %411
    %vm413 = vcmask 392192
    %v414 = vsel %vm413, %v410, %v412
    %s416 = scalar_lea.vmem [#allocation7], 8
    %417 = vst.msk [vmem:[%s416] sm:$0xff] %vm405, %v414
    // Predicated region
    $region22: #{tpu_custom_call.1} parent=1 // pred_check
      _
    $region23: #{tpu_custom_call.1} parent=1 // pred_check_branch
      %419 = sbr.rel (0) target = $region25
    $region24: #{tpu_custom_call.1} parent=1 // pred_region
      %s421 = ssub.s32 256, 256
      %422 = vsyncadd [#allocation6], %s421
      %s423 = sshll.u32 [#allocation7], 4
      %s424 = int_to_ptr.vmem [resolvable:$true] %s423
      %429 = dma.vmem_to_hbm [thread:$0]  %s424, 256, %s3, [#allocation6], 128, 128, 8
    $region25: #{tpu_custom_call.1} parent=1 // pred_fallthru
      _
    // Predicated region
    $region26: #{tpu_custom_call.1} parent=1 // pred_check
      _
    $region27: #{tpu_custom_call.1} parent=1 // pred_check_branch
      %431 = sbr.rel (0) target = $region29
    $region28: #{tpu_custom_call.1} parent=1 // pred_region
      %432 = dma.done [#allocation6], 256
    $region29: #{tpu_custom_call.1} parent=1 // pred_fallthru
      _
    %433 = vsyncpa [#allocation5], 1
    %434 = vsyncpa [#allocation6], 1

</llo_original>
